<compile_context>
chip_gen: v7x
topology: tpu7x:2x2x1
jax: 0.10.0
libtpu: 0.0.40
codegen_flags: <defaults>
</compile_context>

<pallas_src>
import functools

import jax
import jax.numpy as jnp
from jax.experimental import pallas as pl
from jax.experimental.pallas import tpu as pltpu

LOG_STD_MIN = -10.0
LOG_STD_MAX = 2.0
ACT_LIMIT = 1.0
HALF_LOG_2PI = 0.9189385332046727  # 0.5 * log(2*pi)
LOG_2 = 0.6931471805599453


def _round_up(x, m):
    return ((x + m - 1) // m) * m


def _softplus(x):
    # numerically stable softplus
    return jnp.maximum(x, 0.0) + jnp.log1p(jnp.exp(-jnp.abs(x)))


def _squashed_gaussian_kernel(
    state_ref, w1_ref, b1_ref, w2_ref, b2_ref, wh_ref, bh_ref, eps_ref,
    out_ref,
    *, deterministic, with_logprob,
):
    A = eps_ref.shape[1]
    x = state_ref[...]  # (TB, D) f32

    # --- MLP trunk: Linear -> ReLU -> Linear -> ReLU (f32 math, bf16 weights) ---
    h = jnp.dot(x, w1_ref[...].astype(jnp.float32),
                preferred_element_type=jnp.float32) + b1_ref[...].astype(jnp.float32)
    h = jnp.maximum(h, 0.0)
    h = jnp.dot(h, w2_ref[...].astype(jnp.float32),
                preferred_element_type=jnp.float32) + b2_ref[...].astype(jnp.float32)
    h = jnp.maximum(h, 0.0)

    # --- fused Gaussian heads: single (H, 2A) matmul, then static lane split ---
    heads = jnp.dot(h, wh_ref[...].astype(jnp.float32),
                    preferred_element_type=jnp.float32) + bh_ref[...].astype(jnp.float32)
    mu = heads[:, :A]
    log_std = jnp.clip(heads[:, A:], LOG_STD_MIN, LOG_STD_MAX)

    # --- sample: rsample (a = mu + std*eps) or mode (a = mu) ---
    if deterministic:
        a = mu
    else:
        a = mu + jnp.exp(log_std) * eps_ref[...]

    action = jnp.tanh(a)
    if ACT_LIMIT != 1.0:
        action = action * ACT_LIMIT
    out_ref[:, :A] = action

    if with_logprob:
        # (a - mu)/std == eps exactly (0 in deterministic mode) -> no divide.
        zsq = jnp.zeros_like(a) if deterministic else eps_ref[...] * eps_ref[...]
        normal_lp = -0.5 * zsq - log_std - HALF_LOG_2PI
        corr = 2.0 * (LOG_2 - a - _softplus(-2.0 * a))
        # single fused cross-lane reduction
        out_ref[:, A:] = jnp.sum(normal_lp - corr, axis=1, keepdims=True)
    else:
        out_ref[:, A:] = jnp.zeros((out_ref.shape[0], 1), out_ref.dtype)


@functools.partial(jax.jit, static_argnames=("deterministic", "with_logprob", "block_b"))
def squashed_gaussian_policy(state, params, eps, *, deterministic=False,
                             with_logprob=True, block_b=512):
    """state: (B, D) f32, eps: (B, A) f32 standard-normal noise.

    Returns (action (B, A), logp (B, 1) or None)."""
    B, D = state.shape
    A = eps.shape[1]
    H = params["w1"].shape[1]

    # Fuse mu / log_std head params into one (H, 2A) weight and (1, 2A) bias.
    wh = jnp.concatenate([params["wmu"], params["wls"]], axis=1)
    bh = jnp.concatenate([params["bmu"], params["bls"]], axis=1)

    # Tile batch; pad so every grid step sees a full (TB, .) block (TB % 8 == 0).
    TB = min(block_b, _round_up(B, 8))
    B_pad = _round_up(B, TB)
    if B_pad != B:
        state = jnp.pad(state, ((0, B_pad - B), (0, 0)))
        eps = jnp.pad(eps, ((0, B_pad - B), (0, 0)))
    n_blocks = B_pad // TB

    kernel = functools.partial(_squashed_gaussian_kernel,
                               deterministic=deterministic,
                               with_logprob=with_logprob)

    resident = lambda i: (0, 0)   # weights stay in VMEM across grid steps
    batched = lambda i: (i, 0)    # batch-tiled arrays

    grid_spec = pltpu.PrefetchScalarGridSpec(
        num_scalar_prefetch=0,
        grid=(n_blocks,),
        in_specs=[
            pl.BlockSpec((TB, D), batched),      # state
            pl.BlockSpec((D, H), resident),      # w1 (bf16)
            pl.BlockSpec((1, H), resident),      # b1
            pl.BlockSpec((H, H), resident),      # w2 (bf16)
            pl.BlockSpec((1, H), resident),      # b2
            pl.BlockSpec((H, 2 * A), resident),  # fused head weight (bf16)
            pl.BlockSpec((1, 2 * A), resident),  # fused head bias
            pl.BlockSpec((TB, A), batched),      # eps
        ],
        out_specs=pl.BlockSpec((TB, A + 1), batched),  # packed [action | logp]
    )

    flops = 2 * B_pad * (D * H + H * H + H * 2 * A)
    transcendentals = 4 * B_pad * A
    bytes_accessed = (4 * B_pad * (D + A + (A + 1))              # f32 activations/outputs
                      + 2 * (D * H + H * H + 2 * A * H + 2 * H + 2 * A))  # bf16 params

    packed = pl.pallas_call(
        kernel,
        out_shape=jax.ShapeDtypeStruct((B_pad, A + 1), jnp.float32),
        grid_spec=grid_spec,
        compiler_params=pltpu.CompilerParams(
            dimension_semantics=("parallel",),
            vmem_limit_bytes=32 * 1024 * 1024,
        ),
        cost_estimate=pl.CostEstimate(
            flops=flops, transcendentals=transcendentals,
            bytes_accessed=bytes_accessed),
    )(state, params["w1"], params["b1"], params["w2"], params["b2"], wh, bh, eps)

    action = packed[:B, :A]
    logp = packed[:B, A:] if with_logprob else None
    return action, logp


def init_params(key, input_dim, hidden, action_dim, dtype=jnp.bfloat16):
    """Deterministic synthetic init. Weights stored as (in, out) in bf16."""
    ks = jax.random.split(key, 4)
    scale = 0.1

    def w(k, shape):
        return (scale * jax.random.normal(k, shape, jnp.float32)).astype(dtype)

    return {
        "w1": w(ks[0], (input_dim, hidden)),
        "b1": jnp.zeros((1, hidden), dtype),
        "w2": w(ks[1], (hidden, hidden)),
        "b2": jnp.zeros((1, hidden), dtype),
        "wmu": w(ks[2], (hidden, action_dim)),
        "bmu": jnp.zeros((1, action_dim), dtype),
        "wls": w(ks[3], (hidden, action_dim)),
        "bls": jnp.zeros((1, action_dim), dtype),
    }


def reference_forward(state, params, eps, deterministic=False, with_logprob=True):
    """Pure-JAX reference mirroring the PyTorch forward (use_cnn=False)."""
    p = {k: v.astype(jnp.float32) for k, v in params.items()}
    h = jnp.maximum(state @ p["w1"] + p["b1"], 0.0)
    h = jnp.maximum(h @ p["w2"] + p["b2"], 0.0)
    mu = h @ p["wmu"] + p["bmu"]
    log_std = jnp.clip(h @ p["wls"] + p["bls"], LOG_STD_MIN, LOG_STD_MAX)
    std = jnp.exp(log_std)
    a = mu if deterministic else mu + std * eps
    if with_logprob:
        lp = jnp.sum(-0.5 * ((a - mu) / std) ** 2 - log_std - HALF_LOG_2PI,
                     axis=1, keepdims=True)
        lp = lp - jnp.sum(2.0 * (jnp.log(2.0) - a - jax.nn.softplus(-2.0 * a)),
                          axis=1, keepdims=True)
    else:
        lp = None
    return jnp.tanh(a) * ACT_LIMIT, lp


if __name__ == "__main__":
    B, D, H, A = 8, 32, 64, 4  # batch, state_dim (input_dim_actor), hidden, action_dim

    key = jax.random.PRNGKey(0)
    k_state, k_params, k_eps, k_state2, k_eps2 = jax.random.split(key, 5)

    state = jax.random.normal(k_state, (B, D), jnp.float32)
    params = init_params(k_params, D, H, A)
    eps = jax.random.normal(k_eps, (B, A), jnp.float32)  # rsample noise

    # 1) default forward: stochastic sample + log-prob
    action, logp = squashed_gaussian_policy(state, params, eps)
    action, logp = jax.block_until_ready((action, logp))
    ref_action, ref_logp = reference_forward(state, params, eps)
    assert action.shape == (B, A) and logp.shape == (B, 1)
    assert jnp.allclose(action, ref_action, atol=1e-4, rtol=1e-4)
    assert jnp.allclose(logp, ref_logp, atol=1e-3, rtol=1e-3)

    # 2) larger, non-multiple batch exercising the grid + padding path
    B2 = 200
    state2 = jax.random.normal(k_state2, (B2, D), jnp.float32)
    eps2 = jax.random.normal(k_eps2, (B2, A), jnp.float32)
    action2, logp2 = squashed_gaussian_policy(state2, params, eps2, block_b=128)
    action2, logp2 = jax.block_until_ready((action2, logp2))
    ref_action2, ref_logp2 = reference_forward(state2, params, eps2)
    assert action2.shape == (B2, A) and logp2.shape == (B2, 1)
    assert jnp.allclose(action2, ref_action2, atol=1e-4, rtol=1e-4)
    assert jnp.allclose(logp2, ref_logp2, atol=1e-3, rtol=1e-3)

    # 3) deterministic / no-log-prob inference specialization
    det_action, det_logp = squashed_gaussian_policy(
        state, params, eps, deterministic=True, with_logprob=False)
    det_action = jax.block_until_ready(det_action)
    ref_det_action, _ = reference_forward(state, params, eps,
                                          deterministic=True, with_logprob=False)
    assert det_logp is None
    assert jnp.allclose(det_action, ref_det_action, atol=1e-4, rtol=1e-4)

    print("KERNEL_OK")
</pallas_src>

<mosaic_0001>
module attributes {stable_mosaic.version = 11 : i64} {
  func.func @_squashed_gaussian_kernel(%arg0: i32, %arg1: memref<8x32xf32, #tpu.memory_space<vmem>>, %arg2: memref<32x64xbf16, #tpu.memory_space<vmem>>, %arg3: memref<1x64xbf16, #tpu.memory_space<vmem>>, %arg4: memref<64x64xbf16, #tpu.memory_space<vmem>>, %arg5: memref<1x64xbf16, #tpu.memory_space<vmem>>, %arg6: memref<64x8xbf16, #tpu.memory_space<vmem>>, %arg7: memref<1x8xbf16, #tpu.memory_space<vmem>>, %arg8: memref<8x4xf32, #tpu.memory_space<vmem>>, %arg9: memref<8x5xf32, #tpu.memory_space<vmem>>) attributes {dimension_semantics = [#tpu.dimension_semantics<parallel>], iteration_bounds = array<i64: 1>, scalar_prefetch = 0 : i64, scratch_operands = 0 : i64, tpu.core_type = #tpu.core_type<tc>, window_params = [{transform_indices = @transform_0, window_bounds = array<i64: 8, 32>}, {pipeline_mode = #tpu.pipeline_mode<synchronous>, transform_indices = @transform_1, window_bounds = array<i64: 32, 64>}, {pipeline_mode = #tpu.pipeline_mode<synchronous>, transform_indices = @transform_2, window_bounds = array<i64: 1, 64>}, {pipeline_mode = #tpu.pipeline_mode<synchronous>, transform_indices = @transform_3, window_bounds = array<i64: 64, 64>}, {pipeline_mode = #tpu.pipeline_mode<synchronous>, transform_indices = @transform_4, window_bounds = array<i64: 1, 64>}, {pipeline_mode = #tpu.pipeline_mode<synchronous>, transform_indices = @transform_5, window_bounds = array<i64: 64, 8>}, {pipeline_mode = #tpu.pipeline_mode<synchronous>, transform_indices = @transform_6, window_bounds = array<i64: 1, 8>}, {transform_indices = @transform_7, window_bounds = array<i64: 8, 4>}, {transform_indices = @transform_8, window_bounds = array<i64: 8, 5>}]} {
    %c0 = arith.constant 0 : index
    %c0_0 = arith.constant 0 : index
    %0 = vector.load %arg1[%c0, %c0_0] : memref<8x32xf32, #tpu.memory_space<vmem>>, vector<8x32xf32>
    %c0_1 = arith.constant 0 : index
    %c0_2 = arith.constant 0 : index
    %1 = vector.load %arg2[%c0_1, %c0_2] : memref<32x64xbf16, #tpu.memory_space<vmem>>, vector<32x64xbf16>
    %2 = arith.extf %1 : vector<32x64xbf16> to vector<32x64xf32>
    %cst = arith.constant dense<0.000000e+00> : vector<8x64xf32>
    %3 = tpu.matmul %0, %2, %cst {dimension_numbers = #tpu.dot_dimension_numbers<[1], [0], [0], [1], [0, 0, 1, 1], [], []>} : vector<8x32xf32>, vector<32x64xf32>, vector<8x64xf32> -> vector<8x64xf32>
    %c0_3 = arith.constant 0 : index
    %c0_4 = arith.constant 0 : index
    %4 = vector.load %arg3[%c0_3, %c0_4] : memref<1x64xbf16, #tpu.memory_space<vmem>>, vector<1x64xbf16>
    %5 = arith.extf %4 : vector<1x64xbf16> to vector<1x64xf32>
    %6 = vector.broadcast %5 : vector<1x64xf32> to vector<8x64xf32>
    %7 = arith.addf %3, %6 : vector<8x64xf32>
    %cst_5 = arith.constant 0.000000e+00 : f32
    %8 = vector.broadcast %cst_5 : f32 to vector<8x64xf32>
    %9 = arith.maximumf %7, %8 : vector<8x64xf32>
    %c0_6 = arith.constant 0 : index
    %c0_7 = arith.constant 0 : index
    %10 = vector.load %arg4[%c0_6, %c0_7] : memref<64x64xbf16, #tpu.memory_space<vmem>>, vector<64x64xbf16>
    %11 = arith.extf %10 : vector<64x64xbf16> to vector<64x64xf32>
    %cst_8 = arith.constant dense<0.000000e+00> : vector<8x64xf32>
    %12 = tpu.matmul %9, %11, %cst_8 {dimension_numbers = #tpu.dot_dimension_numbers<[1], [0], [0], [1], [0, 0, 1, 1], [], []>} : vector<8x64xf32>, vector<64x64xf32>, vector<8x64xf32> -> vector<8x64xf32>
    %c0_9 = arith.constant 0 : index
    %c0_10 = arith.constant 0 : index
    %13 = vector.load %arg5[%c0_9, %c0_10] : memref<1x64xbf16, #tpu.memory_space<vmem>>, vector<1x64xbf16>
    %14 = arith.extf %13 : vector<1x64xbf16> to vector<1x64xf32>
    %15 = vector.broadcast %14 : vector<1x64xf32> to vector<8x64xf32>
    %16 = arith.addf %12, %15 : vector<8x64xf32>
    %cst_11 = arith.constant 0.000000e+00 : f32
    %17 = vector.broadcast %cst_11 : f32 to vector<8x64xf32>
    %18 = arith.maximumf %16, %17 : vector<8x64xf32>
    %c0_12 = arith.constant 0 : index
    %c0_13 = arith.constant 0 : index
    %19 = vector.load %arg6[%c0_12, %c0_13] : memref<64x8xbf16, #tpu.memory_space<vmem>>, vector<64x8xbf16>
    %20 = arith.extf %19 : vector<64x8xbf16> to vector<64x8xf32>
    %cst_14 = arith.constant dense<0.000000e+00> : vector<8x8xf32>
    %21 = tpu.matmul %18, %20, %cst_14 {dimension_numbers = #tpu.dot_dimension_numbers<[1], [0], [0], [1], [0, 0, 1, 1], [], []>} : vector<8x64xf32>, vector<64x8xf32>, vector<8x8xf32> -> vector<8x8xf32>
    %c0_15 = arith.constant 0 : index
    %c0_16 = arith.constant 0 : index
    %22 = vector.load %arg7[%c0_15, %c0_16] : memref<1x8xbf16, #tpu.memory_space<vmem>>, vector<1x8xbf16>
    %23 = arith.extf %22 : vector<1x8xbf16> to vector<1x8xf32>
    %24 = vector.broadcast %23 : vector<1x8xf32> to vector<8x8xf32>
    %25 = arith.addf %21, %24 : vector<8x8xf32>
    %26 = vector.extract_strided_slice %25 {offsets = [0, 0], sizes = [8, 4], strides = [1, 1]} : vector<8x8xf32> to vector<8x4xf32>
    %27 = vector.extract_strided_slice %25 {offsets = [0, 4], sizes = [8, 4], strides = [1, 1]} : vector<8x8xf32> to vector<8x4xf32>
    %cst_17 = arith.constant -1.000000e+01 : f32
    %cst_18 = arith.constant 2.000000e+00 : f32
    %28 = vector.broadcast %cst_17 : f32 to vector<8x4xf32>
    %29 = arith.maximumf %28, %27 : vector<8x4xf32>
    %30 = vector.broadcast %cst_18 : f32 to vector<8x4xf32>
    %31 = arith.minimumf %30, %29 : vector<8x4xf32>
    %32 = math.exp %31 : vector<8x4xf32>
    %c0_19 = arith.constant 0 : index
    %c0_20 = arith.constant 0 : index
    %33 = vector.load %arg8[%c0_19, %c0_20] : memref<8x4xf32, #tpu.memory_space<vmem>>, vector<8x4xf32>
    %34 = arith.mulf %32, %33 : vector<8x4xf32>
    %35 = arith.addf %26, %34 : vector<8x4xf32>
    %36 = math.tanh %35 : vector<8x4xf32>
    %c0_21 = arith.constant 0 : index
    %c0_22 = arith.constant 0 : index
    %37 = vector.load %arg9[%c0_21, %c0_22] : memref<8x5xf32, #tpu.memory_space<vmem>>, vector<8x4xf32>
    tpu.vector_store %arg9[%c0_21, %c0_22], %36 {strides = array<i32>} : memref<8x5xf32, #tpu.memory_space<vmem>>, vector<8x4xf32>,
    %c0_23 = arith.constant 0 : index
    %c0_24 = arith.constant 0 : index
    %38 = vector.load %arg8[%c0_23, %c0_24] : memref<8x4xf32, #tpu.memory_space<vmem>>, vector<8x4xf32>
    %c0_25 = arith.constant 0 : index
    %c0_26 = arith.constant 0 : index
    %39 = vector.load %arg8[%c0_25, %c0_26] : memref<8x4xf32, #tpu.memory_space<vmem>>, vector<8x4xf32>
    %40 = arith.mulf %38, %39 : vector<8x4xf32>
    %cst_27 = arith.constant -5.000000e-01 : f32
    %41 = vector.broadcast %cst_27 : f32 to vector<8x4xf32>
    %42 = arith.mulf %41, %40 : vector<8x4xf32>
    %43 = arith.subf %42, %31 : vector<8x4xf32>
    %cst_28 = arith.constant 0.918938517 : f32
    %44 = vector.broadcast %cst_28 : f32 to vector<8x4xf32>
    %45 = arith.subf %43, %44 : vector<8x4xf32>
    %cst_29 = arith.constant 0.693147182 : f32
    %46 = vector.broadcast %cst_29 : f32 to vector<8x4xf32>
    %47 = arith.subf %46, %35 : vector<8x4xf32>
    %cst_30 = arith.constant -2.000000e+00 : f32
    %48 = vector.broadcast %cst_30 : f32 to vector<8x4xf32>
    %49 = arith.mulf %48, %35 : vector<8x4xf32>
    %cst_31 = arith.constant 0.000000e+00 : f32
    %50 = vector.broadcast %cst_31 : f32 to vector<8x4xf32>
    %51 = arith.maximumf %49, %50 : vector<8x4xf32>
    %52 = math.absf %49 : vector<8x4xf32>
    %cst_32 = arith.constant 0.000000e+00 : f32
    %53 = vector.broadcast %cst_32 : f32 to vector<8x4xf32>
    %54 = arith.subf %53, %52 : vector<8x4xf32>
    %55 = math.exp %54 : vector<8x4xf32>
    %56 = math.log1p %55 : vector<8x4xf32>
    %57 = arith.addf %51, %56 : vector<8x4xf32>
    %58 = arith.subf %47, %57 : vector<8x4xf32>
    %cst_33 = arith.constant 2.000000e+00 : f32
    %59 = vector.broadcast %cst_33 : f32 to vector<8x4xf32>
    %60 = arith.mulf %59, %58 : vector<8x4xf32>
    %61 = arith.subf %45, %60 : vector<8x4xf32>
    %cst_34 = arith.constant dense<0.000000e+00> : vector<8xf32>
    %62 = vector.multi_reduction <add>, %61, %cst_34 [1] : vector<8x4xf32> to vector<8xf32>
    %63 = vector.shape_cast %62 : vector<8xf32> to vector<8x1xf32>
    %c0_35 = arith.constant 0 : index
    %c4 = arith.constant 4 : index
    %64 = vector.load %arg9[%c0_35, %c4] : memref<8x5xf32, #tpu.memory_space<vmem>>, vector<8x1xf32>
    tpu.vector_store %arg9[%c0_35, %c4], %63 {strides = array<i32>} : memref<8x5xf32, #tpu.memory_space<vmem>>, vector<8x1xf32>,
    return
  }
  func.func @transform_0(%arg0: i32) -> (i32, i32) {
    %c0_i32 = arith.constant 0 : i32
    %c0_i32_0 = arith.constant 0 : i32
    return %arg0, %c0_i32 : i32, i32
  }
  func.func @transform_1(%arg0: i32) -> (i32, i32) {
    %c0_i32 = arith.constant 0 : i32
    %c0_i32_0 = arith.constant 0 : i32
    %c0_i32_1 = arith.constant 0 : i32
    return %c0_i32, %c0_i32_0 : i32, i32
  }
  func.func @transform_2(%arg0: i32) -> (i32, i32) {
    %c0_i32 = arith.constant 0 : i32
    %c0_i32_0 = arith.constant 0 : i32
    %c0_i32_1 = arith.constant 0 : i32
    return %c0_i32, %c0_i32_0 : i32, i32
  }
  func.func @transform_3(%arg0: i32) -> (i32, i32) {
    %c0_i32 = arith.constant 0 : i32
    %c0_i32_0 = arith.constant 0 : i32
    %c0_i32_1 = arith.constant 0 : i32
    return %c0_i32, %c0_i32_0 : i32, i32
  }
  func.func @transform_4(%arg0: i32) -> (i32, i32) {
    %c0_i32 = arith.constant 0 : i32
    %c0_i32_0 = arith.constant 0 : i32
    %c0_i32_1 = arith.constant 0 : i32
    return %c0_i32, %c0_i32_0 : i32, i32
  }
  func.func @transform_5(%arg0: i32) -> (i32, i32) {
    %c0_i32 = arith.constant 0 : i32
    %c0_i32_0 = arith.constant 0 : i32
    %c0_i32_1 = arith.constant 0 : i32
    return %c0_i32, %c0_i32_0 : i32, i32
  }
  func.func @transform_6(%arg0: i32) -> (i32, i32) {
    %c0_i32 = arith.constant 0 : i32
    %c0_i32_0 = arith.constant 0 : i32
    %c0_i32_1 = arith.constant 0 : i32
    return %c0_i32, %c0_i32_0 : i32, i32
  }
  func.func @transform_7(%arg0: i32) -> (i32, i32) {
    %c0_i32 = arith.constant 0 : i32
    %c0_i32_0 = arith.constant 0 : i32
    return %arg0, %c0_i32 : i32, i32
  }
  func.func @transform_8(%arg0: i32) -> (i32, i32) {
    %c0_i32 = arith.constant 0 : i32
    %c0_i32_0 = arith.constant 0 : i32
    return %arg0, %c0_i32 : i32, i32
  }
}

</mosaic_0001>

<llo_original>
// kernel: squashed_gaussian_policy.1
$region0: #{squashed_gaussian_policy.1}
  #allocation0 [shape = 'u32[]', space=smem, size = 0x4, offset = 0x4, fixed_abs, tag = 'smem constant byte address 0x4 - core index']
  #allocation1 [shape = 'u32[144,128]{1,0:T(1,128)}', space=vmem, size = 0x12000, scoped, tag = 'internal scratch']
  %s0 = inlined_call_operand.vmem [shape: f32[8,32], index: 0, kind: input, shape index: {}]
  %s1 = inlined_call_operand.vmem [shape: bf16[32,64], index: 1, kind: input, shape index: {}]
  %s2 = inlined_call_operand.vmem [shape: bf16[1,64], index: 2, kind: input, shape index: {}]
  %s3 = inlined_call_operand.vmem [shape: bf16[64,64], index: 3, kind: input, shape index: {}]
  %s4 = inlined_call_operand.vmem [shape: bf16[1,64], index: 4, kind: input, shape index: {}]
  %s5 = inlined_call_operand.vmem [shape: bf16[64,8], index: 5, kind: input, shape index: {}]
  %s6 = inlined_call_operand.vmem [shape: bf16[1,8], index: 6, kind: input, shape index: {}]
  %s7 = inlined_call_operand.vmem [shape: f32[8,4], index: 7, kind: input, shape index: {}]
  %s8 = inlined_call_operand.vmem [shape: f32[8,5], index: 8, kind: output, shape index: {}]
  %s9 = sld [smem:[#allocation0]]
  $region42: #{squashed_gaussian_policy.1} parent=0
    _
  %s11 = ssub.s32 1, %s9
  %s12 = scalar_select 0, %s11, %s9
  // Predicated region
  $region2: #{squashed_gaussian_policy.1} parent=0 // pred_check
    _
  $region3: #{squashed_gaussian_policy.1} parent=0 // pred_check_branch
    %14 = sbr.rel (0) target = $region5
  $region4: #{squashed_gaussian_policy.1} parent=0 // pred_region
    _
  $region5: #{squashed_gaussian_policy.1} parent=0 // pred_fallthru
    _
  // Predicated region
  $region6: #{squashed_gaussian_policy.1} parent=0 // pred_check
    _
  $region7: #{squashed_gaussian_policy.1} parent=0 // pred_check_branch
    %16 = sbr.rel (0) target = $region9
  $region8: #{squashed_gaussian_policy.1} parent=0 // pred_region
    _
  $region9: #{squashed_gaussian_policy.1} parent=0 // pred_fallthru
    _
  // Predicated region
  $region10: #{squashed_gaussian_policy.1} parent=0 // pred_check
    _
  $region11: #{squashed_gaussian_policy.1} parent=0 // pred_check_branch
    %18 = sbr.rel (0) target = $region13
  $region12: #{squashed_gaussian_policy.1} parent=0 // pred_region
    _
  $region13: #{squashed_gaussian_policy.1} parent=0 // pred_fallthru
    _
  // Predicated region
  $region14: #{squashed_gaussian_policy.1} parent=0 // pred_check
    _
  $region15: #{squashed_gaussian_policy.1} parent=0 // pred_check_branch
    %20 = sbr.rel (0) target = $region17
  $region16: #{squashed_gaussian_policy.1} parent=0 // pred_region
    _
  $region17: #{squashed_gaussian_policy.1} parent=0 // pred_fallthru
    _
  // Predicated region
  $region18: #{squashed_gaussian_policy.1} parent=0 // pred_check
    _
  $region19: #{squashed_gaussian_policy.1} parent=0 // pred_check_branch
    %22 = sbr.rel (0) target = $region21
  $region20: #{squashed_gaussian_policy.1} parent=0 // pred_region
    _
  $region21: #{squashed_gaussian_policy.1} parent=0 // pred_fallthru
    _
  // Predicated region
  $region22: #{squashed_gaussian_policy.1} parent=0 // pred_check
    _
  $region23: #{squashed_gaussian_policy.1} parent=0 // pred_check_branch
    %24 = sbr.rel (0) target = $region25
  $region24: #{squashed_gaussian_policy.1} parent=0 // pred_region
    _
  $region25: #{squashed_gaussian_policy.1} parent=0 // pred_fallthru
    _
  // Predicated region
  $region26: #{squashed_gaussian_policy.1} parent=0 // pred_check
    _
  $region27: #{squashed_gaussian_policy.1} parent=0 // pred_check_branch
    %26 = sbr.rel (0) target = $region29
  $region28: #{squashed_gaussian_policy.1} parent=0 // pred_region
    _
  $region29: #{squashed_gaussian_policy.1} parent=0 // pred_fallthru
    _
  // Predicated region
  $region30: #{squashed_gaussian_policy.1} parent=0 // pred_check
    _
  $region31: #{squashed_gaussian_policy.1} parent=0 // pred_check_branch
    %28 = sbr.rel (0) target = $region33
  $region32: #{squashed_gaussian_policy.1} parent=0 // pred_region
    _
  $region33: #{squashed_gaussian_policy.1} parent=0 // pred_fallthru
    _
  %v29 = vld [vmem:[%s0] sm:$0xff]
  %v30 = vld [vmem:[%s1] sm:$0xf]
  %v31 = vld [vmem:[%s1 + $0x4] sm:$0xf]
  %v32 = vld [vmem:[%s1 + $0x8] sm:$0xf]
  %v33 = vld [vmem:[%s1 + $0xc] sm:$0xf]
  %v34 = vunpack.c.l.bf16 %v30
  %v35 = vunpack.c.l.bf16 %v31
  %v36 = vunpack.c.l.bf16 %v32
  %v37 = vunpack.c.l.bf16 %v33
  %v38 = vld [vmem:[%s2] sm:$0x1]
  %v39 = vunpack.c.l.bf16 %v38
  %v40 = vlaneseq
  %v41 = vshrl.u32 %v40, 7
  %v42 = vsub.s32 0, %v41
  %v43 = vrot.slane %v39, %v42
  %vm44 = vcmask 261120
  %v46 = vsel %vm44, %v29, 0
  %48 = vmatprep.subr.mxu0 0.0
  %49 = vmatpush1.msra.mxu0 %v34
  %50 = vmatprep.subr.mxu0 0.0
  %51 = vmatpush1.msra.mxu0 %v35
  %52 = vmatprep.subr.mxu0 0.0
  %53 = vmatpush1.msra.mxu0 %v36
  %54 = vmatprep.subr.mxu0 0.0
  %55 = vmatpush1.msra.mxu0 %v37
  %56 = vmatprep.subr.mxu0 0.0
  %57 = vmatpush1.msra.mxu0 0.0
  %58 = vmatprep.subr.mxu0 0.0
  %59 = vmatpush1.msra.mxu0 0.0
  %60 = vmatprep.subr.mxu0 0.0
  %61 = vmatpush1.msra.mxu0 0.0
  %62 = vmatprep.subr.mxu0 0.0
  %63 = vmatpush1.msra.mxu0 0.0
  %64 = vmatprep.subr.mxu0 0.0
  %65 = vmatpush1.msra.mxu0 0.0
  %66 = vmatprep.subr.mxu0 0.0
  %67 = vmatpush1.msra.mxu0 0.0
  %68 = vmatprep.subr.mxu0 0.0
  %69 = vmatpush1.msra.mxu0 0.0
  %70 = vmatprep.subr.mxu0 0.0
  %71 = vmatpush1.msra.mxu0 0.0
  %72 = vmatprep.subr.mxu0 0.0
  %73 = vmatpush1.msra.mxu0 0.0
  %74 = vmatprep.subr.mxu0 0.0
  %75 = vmatpush1.msra.mxu0 0.0
  %76 = vmatprep.subr.mxu0 0.0
  %77 = vmatpush1.msra.mxu0 0.0
  %78 = vmatprep.subr.mxu0 0.0
  %79 = vmatpush1.msra.mxu0 0.0
  %80 = vmatprep.subr.mxu0 0.0
  %81 = vmatpush1.msra.mxu0 0.0
  %82 = vmatprep.subr.mxu0 0.0
  %83 = vmatpush1.msra.mxu0 0.0
  %84 = vmatprep.subr.mxu0 0.0
  %85 = vmatpush1.msra.mxu0 0.0
  %86 = vmatprep.subr.mxu0 0.0
  %87 = vmatpush1.msra.mxu0 0.0
  %88 = vmatprep.subr.mxu0 0.0
  %89 = vmatpush1.msra.mxu0 0.0
  %90 = vmatprep.subr.mxu0 0.0
  %91 = vmatpush1.msra.mxu0 0.0
  %92 = vmatprep.subr.mxu0 0.0
  %93 = vmatpush1.msra.mxu0 0.0
  %94 = vmatprep.subr.mxu0 0.0
  %95 = vmatpush1.msra.mxu0 0.0
  %96 = vmatprep.subr.mxu0 0.0
  %97 = vmatpush1.msra.mxu0 0.0
  %98 = vmatprep.subr.mxu0 0.0
  %99 = vmatpush1.msra.mxu0 0.0
  %100 = vmatprep.subr.mxu0 0.0
  %101 = vmatpush1.msra.mxu0 0.0
  %102 = vmatprep.subr.mxu0 0.0
  %103 = vmatpush1.msra.mxu0 0.0
  %104 = vmatprep.subr.mxu0 0.0
  %105 = vmatpush1.msra.mxu0 0.0
  %106 = vmatprep.subr.mxu0 0.0
  %107 = vmatpush1.msra.mxu0 0.0
  %108 = vmatprep.subr.mxu0 0.0
  %109 = vmatpush1.msra.mxu0 0.0
  %110 = vmatprep.subr.mxu0 0.0
  %111 = vmatpush1.msra.mxu0 0.0
  %112 = vmatprep.mubr.f32.mxu0 0.0
  %113 = vmatmul.mubr.f32.gmra.mrb[0].mxu0 %v46
  %v114 = vpop.f32.mrb[0].mxu0
  %v115 = vadd.f32 %v43, %v114
  %v116 = vpop.f32.mrb[0].mxu0
  %117 = vdwg.mxu0
  %v118 = vmax.f32 %v115, 0.0
  %v119 = vld [vmem:[%s3] sm:$0xf]
  %v120 = vld [vmem:[%s3 + $0x4] sm:$0xf]
  %v121 = vld [vmem:[%s3 + $0x8] sm:$0xf]
  %v122 = vld [vmem:[%s3 + $0xc] sm:$0xf]
  %v123 = vld [vmem:[%s3 + $0x10] sm:$0xf]
  %v124 = vld [vmem:[%s3 + $0x14] sm:$0xf]
  %v125 = vld [vmem:[%s3 + $0x18] sm:$0xf]
  %v126 = vld [vmem:[%s3 + $0x1c] sm:$0xf]
  %v127 = vunpack.c.l.bf16 %v119
  %v128 = vunpack.c.l.bf16 %v120
  %v129 = vunpack.c.l.bf16 %v121
  %v130 = vunpack.c.l.bf16 %v122
  %v131 = vunpack.c.l.bf16 %v123
  %v132 = vunpack.c.l.bf16 %v124
  %v133 = vunpack.c.l.bf16 %v125
  %v134 = vunpack.c.l.bf16 %v126
  %v135 = vld [vmem:[%s4] sm:$0x1]
  %v136 = vunpack.c.l.bf16 %v135
  %v137 = vlaneseq
  %v138 = vshrl.u32 %v137, 7
  %v139 = vsub.s32 0, %v138
  %v140 = vrot.slane %v136, %v139
  %vm141 = vcmask 523264
  %v143 = vsel %vm141, %v118, 0
  %145 = vmatprep.subr.mxu0 0.0
  %146 = vmatpush1.msra.mxu0 %v127
  %147 = vmatprep.subr.mxu0 0.0
  %148 = vmatpush1.msra.mxu0 %v128
  %149 = vmatprep.subr.mxu0 0.0
  %150 = vmatpush1.msra.mxu0 %v129
  %151 = vmatprep.subr.mxu0 0.0
  %152 = vmatpush1.msra.mxu0 %v130
  %153 = vmatprep.subr.mxu0 0.0
  %154 = vmatpush1.msra.mxu0 %v131
  %155 = vmatprep.subr.mxu0 0.0
  %156 = vmatpush1.msra.mxu0 %v132
  %157 = vmatprep.subr.mxu0 0.0
  %158 = vmatpush1.msra.mxu0 %v133
  %159 = vmatprep.subr.mxu0 0.0
  %160 = vmatpush1.msra.mxu0 %v134
  %161 = vmatprep.subr.mxu0 0.0
  %162 = vmatpush1.msra.mxu0 0.0
  %163 = vmatprep.subr.mxu0 0.0
  %164 = vmatpush1.msra.mxu0 0.0
  %165 = vmatprep.subr.mxu0 0.0
  %166 = vmatpush1.msra.mxu0 0.0
  %167 = vmatprep.subr.mxu0 0.0
  %168 = vmatpush1.msra.mxu0 0.0
  %169 = vmatprep.subr.mxu0 0.0
  %170 = vmatpush1.msra.mxu0 0.0
  %171 = vmatprep.subr.mxu0 0.0
  %172 = vmatpush1.msra.mxu0 0.0
  %173 = vmatprep.subr.mxu0 0.0
  %174 = vmatpush1.msra.mxu0 0.0
  %175 = vmatprep.subr.mxu0 0.0
  %176 = vmatpush1.msra.mxu0 0.0
  %177 = vmatprep.subr.mxu0 0.0
  %178 = vmatpush1.msra.mxu0 0.0
  %179 = vmatprep.subr.mxu0 0.0
  %180 = vmatpush1.msra.mxu0 0.0
  %181 = vmatprep.subr.mxu0 0.0
  %182 = vmatpush1.msra.mxu0 0.0
  %183 = vmatprep.subr.mxu0 0.0
  %184 = vmatpush1.msra.mxu0 0.0
  %185 = vmatprep.subr.mxu0 0.0
  %186 = vmatpush1.msra.mxu0 0.0
  %187 = vmatprep.subr.mxu0 0.0
  %188 = vmatpush1.msra.mxu0 0.0
  %189 = vmatprep.subr.mxu0 0.0
  %190 = vmatpush1.msra.mxu0 0.0
  %191 = vmatprep.subr.mxu0 0.0
  %192 = vmatpush1.msra.mxu0 0.0
  %193 = vmatprep.subr.mxu0 0.0
  %194 = vmatpush1.msra.mxu0 0.0
  %195 = vmatprep.subr.mxu0 0.0
  %196 = vmatpush1.msra.mxu0 0.0
  %197 = vmatprep.subr.mxu0 0.0
  %198 = vmatpush1.msra.mxu0 0.0
  %199 = vmatprep.subr.mxu0 0.0
  %200 = vmatpush1.msra.mxu0 0.0
  %201 = vmatprep.subr.mxu0 0.0
  %202 = vmatpush1.msra.mxu0 0.0
  %203 = vmatprep.subr.mxu0 0.0
  %204 = vmatpush1.msra.mxu0 0.0
  %205 = vmatprep.subr.mxu0 0.0
  %206 = vmatpush1.msra.mxu0 0.0
  %207 = vmatprep.subr.mxu0 0.0
  %208 = vmatpush1.msra.mxu0 0.0
  %209 = vmatprep.mubr.f32.mxu0 0.0
  %210 = vmatmul.mubr.f32.gmra.mrb[0].mxu0 %v143
  %v211 = vpop.f32.mrb[0].mxu0
  %v212 = vadd.f32 %v140, %v211
  %v213 = vpop.f32.mrb[0].mxu0
  %214 = vdwg.mxu0
  %v215 = vmax.f32 %v212, 0.0
  %v216 = vld [vmem:[%s5] sm:$0xf]
  %v217 = vld [vmem:[%s5 + $0x4] sm:$0xf]
  %v218 = vld [vmem:[%s5 + $0x8] sm:$0xf]
  %v219 = vld [vmem:[%s5 + $0xc] sm:$0xf]
  %v220 = vld [vmem:[%s5 + $0x10] sm:$0xf]
  %v221 = vld [vmem:[%s5 + $0x14] sm:$0xf]
  %v222 = vld [vmem:[%s5 + $0x18] sm:$0xf]
  %v223 = vld [vmem:[%s5 + $0x1c] sm:$0xf]
  %v224 = vunpack.c.l.bf16 %v216
  %v225 = vunpack.c.l.bf16 %v217
  %v226 = vunpack.c.l.bf16 %v218
  %v227 = vunpack.c.l.bf16 %v219
  %v228 = vunpack.c.l.bf16 %v220
  %v229 = vunpack.c.l.bf16 %v221
  %v230 = vunpack.c.l.bf16 %v222
  %v231 = vunpack.c.l.bf16 %v223
  %v232 = vld [vmem:[%s6] sm:$0x1]
  %v233 = vunpack.c.l.bf16 %v232
  %v234 = vlaneseq
  %v235 = vshrl.u32 %v234, 7
  %v236 = vsub.s32 0, %v235
  %v237 = vrot.slane %v233, %v236
  %v239 = vsel %vm141, %v215, 0
  %241 = vmatprep.subr.mxu0 0.0
  %242 = vmatpush1.msra.mxu0 %v224
  %243 = vmatprep.subr.mxu0 0.0
  %244 = vmatpush1.msra.mxu0 %v225
  %245 = vmatprep.subr.mxu0 0.0
  %246 = vmatpush1.msra.mxu0 %v226
  %247 = vmatprep.subr.mxu0 0.0
  %248 = vmatpush1.msra.mxu0 %v227
  %249 = vmatprep.subr.mxu0 0.0
  %250 = vmatpush1.msra.mxu0 %v228
  %251 = vmatprep.subr.mxu0 0.0
  %252 = vmatpush1.msra.mxu0 %v229
  %253 = vmatprep.subr.mxu0 0.0
  %254 = vmatpush1.msra.mxu0 %v230
  %255 = vmatprep.subr.mxu0 0.0
  %256 = vmatpush1.msra.mxu0 %v231
  %257 = vmatprep.subr.mxu0 0.0
  %258 = vmatpush1.msra.mxu0 0.0
  %259 = vmatprep.subr.mxu0 0.0
  %260 = vmatpush1.msra.mxu0 0.0
  %261 = vmatprep.subr.mxu0 0.0
  %262 = vmatpush1.msra.mxu0 0.0
  %263 = vmatprep.subr.mxu0 0.0
  %264 = vmatpush1.msra.mxu0 0.0
  %265 = vmatprep.subr.mxu0 0.0
  %266 = vmatpush1.msra.mxu0 0.0
  %267 = vmatprep.subr.mxu0 0.0
  %268 = vmatpush1.msra.mxu0 0.0
  %269 = vmatprep.subr.mxu0 0.0
  %270 = vmatpush1.msra.mxu0 0.0
  %271 = vmatprep.subr.mxu0 0.0
  %272 = vmatpush1.msra.mxu0 0.0
  %273 = vmatprep.subr.mxu0 0.0
  %274 = vmatpush1.msra.mxu0 0.0
  %275 = vmatprep.subr.mxu0 0.0
  %276 = vmatpush1.msra.mxu0 0.0
  %277 = vmatprep.subr.mxu0 0.0
  %278 = vmatpush1.msra.mxu0 0.0
  %279 = vmatprep.subr.mxu0 0.0
  %280 = vmatpush1.msra.mxu0 0.0
  %281 = vmatprep.subr.mxu0 0.0
  %282 = vmatpush1.msra.mxu0 0.0
  %283 = vmatprep.subr.mxu0 0.0
  %284 = vmatpush1.msra.mxu0 0.0
  %285 = vmatprep.subr.mxu0 0.0
  %286 = vmatpush1.msra.mxu0 0.0
  %287 = vmatprep.subr.mxu0 0.0
  %288 = vmatpush1.msra.mxu0 0.0
  %289 = vmatprep.subr.mxu0 0.0
  %290 = vmatpush1.msra.mxu0 0.0
  %291 = vmatprep.subr.mxu0 0.0
  %292 = vmatpush1.msra.mxu0 0.0
  %293 = vmatprep.subr.mxu0 0.0
  %294 = vmatpush1.msra.mxu0 0.0
  %295 = vmatprep.subr.mxu0 0.0
  %296 = vmatpush1.msra.mxu0 0.0
  %297 = vmatprep.subr.mxu0 0.0
  %298 = vmatpush1.msra.mxu0 0.0
  %299 = vmatprep.subr.mxu0 0.0
  %300 = vmatpush1.msra.mxu0 0.0
  %301 = vmatprep.subr.mxu0 0.0
  %302 = vmatpush1.msra.mxu0 0.0
  %303 = vmatprep.subr.mxu0 0.0
  %304 = vmatpush1.msra.mxu0 0.0
  %305 = vmatprep.mubr.f32.mxu0 0.0
  %306 = vmatmul.mubr.f32.gmra.mrb[0].mxu0 %v239
  %v307 = vpop.f32.mrb[0].mxu0
  %v308 = vadd.f32 %v237, %v307
  %v309 = vpop.f32.mrb[0].mxu0
  %310 = vdwg.mxu0
  %v311 = vmax.f32 %v308, -10.0
  %v312 = vmin.f32 %v311, 2.0
  %v313 = vmul.f32 %v312, 1.442695
  %v314 = vpow.pop %v313
  %v315 = vld [vmem:[%s7] sm:$0xff]
  %317 = vrot.lane.b32.xlu0 %v315, 4
  %v318 = vpop.permute.xlu0 %317
  %v320 = vmul.f32 %v314, %v318
  %322 = vrot.lane.b32.xlu0 %v320, 124
  %v323 = vpop.permute.xlu0 %322
  %v325 = vadd.f32 %v308, %v323
  %v326 = vtanh.pop %v325
  %vm327 = vcmask 31744
  %328 = vst.msk [vmem:[%s8] sm:$0xff] %vm327, %v326
  %v329 = vld [vmem:[%s7] sm:$0xff]
  %v330 = vmul.f32 %v329, %v329
  %v331 = vmul.f32 %v330, -0.5
  %333 = vrot.lane.b32.xlu0 %v312, 124
  %v334 = vpop.permute.xlu0 %333
  %v336 = vsub.f32 %v331, %v334
  %v337 = vsub.f32 %v336, 0.9189385
  %v338 = vsub.f32 0.6931472, %v325
  %v339 = vmul.f32 %v325, -2.0
  %v340 = vmax.f32 %v339, 0.0
  %v341 = vand.u32 2147483647, %v339
  %v342 = vsub.f32 0.0, %v341
  %v343 = vmul.f32 %v342, 1.442695
  %v344 = vpow.pop %v343
  %v345 = vadd.f32 %v344, 1.0
  %v346 = vlog2.pop %v345
  %v347 = vmul.f32 %v346, 0.6931472
  %v348 = vmul.f32 -0.5, %v344
  %v349 = vadd.f32 %v348, 1.0
  %v350 = vmul.f32 %v349, %v344
  %v351 = vand.u32 2147483647, %v344
  %vm352 = vcmp.lt.f32.partialorder %v351, 0.0004427343
  %v353 = vsel %vm352, %v350, %v347
  %v354 = vadd.f32 %v340, %v353
  %v355 = vsub.f32 %v338, %v354
  %v356 = vmul.f32 %v355, 2.0
  %v357 = vsub.f32 %v337, %v356
  %v358 = vsel %vm327, %v357, 0.0
  %359 = vadd.xlane.f32.xlu0 %v358
  %v360 = vpop.xlane.xlu0 %359
  %vm361 = vcmask 39968
  %362 = vst.msk [vmem:[%s8] sm:$0xff] %vm361, %v360
  // Predicated region
  $region34: #{squashed_gaussian_policy.1} parent=0 // pred_check
    _
  $region35: #{squashed_gaussian_policy.1} parent=0 // pred_check_branch
    %364 = sbr.rel (0) target = $region37
  $region36: #{squashed_gaussian_policy.1} parent=0 // pred_region
    _
  $region37: #{squashed_gaussian_policy.1} parent=0 // pred_fallthru
    _
  // Predicated region
  $region38: #{squashed_gaussian_policy.1} parent=0 // pred_check
    _
  $region39: #{squashed_gaussian_policy.1} parent=0 // pred_check_branch
    %366 = sbr.rel (0) target = $region41
  $region40: #{squashed_gaussian_policy.1} parent=0 // pred_region
    _
  $region41: #{squashed_gaussian_policy.1} parent=0 // pred_fallthru
    _

</llo_original>
